<compile_context>
chip_gen: v6e
topology: v6e:2x2x1
jax: 0.10.0
libtpu: 0.0.40
codegen_flags: <defaults>
</compile_context>

<pallas_src>
import functools

import jax
import jax.numpy as jnp
from jax.experimental import pallas as pl
from jax.experimental.pallas import tpu as pltpu

_LANE = 128
_SUBLANE = 8
_TM_MAX = 1024  # row-tile cap; double-buffered tiles stay well under VMEM limits


def _round_up(x, m):
    return ((x + m - 1) // m) * m


def _mlp_kernel(x_ref, w0_ref, b0_ref, w1_ref, b1_ref, w2_ref, b2_ref, o_ref):
    """Fused MLP on one row-tile: tanh(xW0+b0) -> tanh(.W1+b1) -> sigmoid(.W2+b2)."""
    x = x_ref[...]
    h = jnp.tanh(
        jnp.dot(x, w0_ref[...], preferred_element_type=jnp.float32) + b0_ref[...]
    )
    h = jnp.tanh(
        jnp.dot(h, w1_ref[...], preferred_element_type=jnp.float32) + b1_ref[...]
    )
    y = jnp.dot(h, w2_ref[...], preferred_element_type=jnp.float32) + b2_ref[...]
    # Padded output columns hold sigmoid(0)=0.5; the wrapper slices them off.
    o_ref[...] = jax.nn.sigmoid(y).astype(o_ref.dtype)


def prepare_params(params):
    """One-time glue: transpose nn.Linear weights (out,in)->(in,out), reshape
    biases to (1, out), and zero-pad the final layer to 128 output lanes so
    the kernel's stores are lane-dense."""
    (w0, b0), (w1, b1), (w2, b2) = params
    dout = w2.shape[0]
    dout_pad = _round_up(dout, _LANE)
    w0t = jnp.asarray(w0.T, jnp.float32)                       # (Din, H0)
    w1t = jnp.asarray(w1.T, jnp.float32)                       # (H0, H1)
    w2t = jnp.pad(jnp.asarray(w2.T, jnp.float32),
                  ((0, 0), (0, dout_pad - dout)))              # (H1, 128)
    b0r = jnp.asarray(b0, jnp.float32).reshape(1, -1)          # (1, H0)
    b1r = jnp.asarray(b1, jnp.float32).reshape(1, -1)          # (1, H1)
    b2r = jnp.pad(jnp.asarray(b2, jnp.float32),
                  (0, dout_pad - dout)).reshape(1, -1)         # (1, 128)
    return (w0t, b0r, w1t, b1r, w2t, b2r)


@functools.partial(jax.jit, static_argnames=("out_dim",))
def euler_maruyama_nn_forward(x, prepared, *, out_dim):
    """x: (B, S, input_dim) float32. prepared: output of prepare_params."""
    w0t, b0r, w1t, b1r, w2t, b2r = prepared
    B, S, din = x.shape
    h0 = w0t.shape[1]
    h1 = w1t.shape[1]
    dout_pad = w2t.shape[1]

    M = B * S
    TM = min(_TM_MAX, _round_up(M, _SUBLANE))
    M_pad = _round_up(M, TM)

    x2d = x.reshape(M, din).astype(jnp.float32)
    if M_pad != M:
        x2d = jnp.pad(x2d, ((0, M_pad - M), (0, 0)))

    grid = (M_pad // TM,)

    out_padded = pl.pallas_call(
        _mlp_kernel,
        out_shape=jax.ShapeDtypeStruct((M_pad, dout_pad), jnp.float32),
        grid=grid,
        in_specs=[
            pl.BlockSpec((TM, din), lambda i: (i, 0)),       # x: tiled over rows
            pl.BlockSpec((din, h0), lambda i: (0, 0)),       # weights: VMEM-resident
            pl.BlockSpec((1, h0), lambda i: (0, 0)),
            pl.BlockSpec((h0, h1), lambda i: (0, 0)),
            pl.BlockSpec((1, h1), lambda i: (0, 0)),
            pl.BlockSpec((h1, dout_pad), lambda i: (0, 0)),
            pl.BlockSpec((1, dout_pad), lambda i: (0, 0)),
        ],
        out_specs=pl.BlockSpec((TM, dout_pad), lambda i: (i, 0)),
        compiler_params=pltpu.CompilerParams(
            dimension_semantics=("parallel",),
        ),
    )(x2d, w0t, b0r, w1t, b1r, w2t, b2r)

    return out_padded[:M, :out_dim].reshape(B, S, out_dim)


def _init_params(key, input_dim, hidden_dims, output_dim):
    """Deterministic Kaiming-uniform-ish init matching nn.Linear shapes (out, in)."""
    dims = [input_dim] + list(hidden_dims) + [output_dim]
    params = []
    for i in range(len(dims) - 1):
        fan_in, fan_out = dims[i], dims[i + 1]
        key, kw, kb = jax.random.split(key, 3)
        bound = 1.0 / jnp.sqrt(fan_in)
        W = jax.random.uniform(kw, (fan_out, fan_in), jnp.float32, -bound, bound)
        b = jax.random.uniform(kb, (fan_out,), jnp.float32, -bound, bound)
        params.append((W, b))
    return params


def _reference_forward(x, params):
    """Pure-JAX reference mirroring the PyTorch forward exactly."""
    (w0, b0), (w1, b1), (w2, b2) = params
    h = jnp.tanh(x @ w0.T + b0)
    h = jnp.tanh(h @ w1.T + b1)
    return jax.nn.sigmoid(h @ w2.T + b2)


if __name__ == "__main__":
    input_dim, hidden_dims, output_dim = 4, [32, 32], 4
    B, S = 2, 8

    key = jax.random.PRNGKey(0)
    key, kx = jax.random.split(key)
    x = jax.random.normal(kx, (B, S, input_dim), jnp.float32)
    params = _init_params(key, input_dim, hidden_dims, output_dim)
    prepared = prepare_params(params)

    # Small-shape run (single tile, grid=(1,)).
    out = euler_maruyama_nn_forward(x, prepared, out_dim=output_dim)
    out = jax.block_until_ready(out)
    ref = _reference_forward(x, params)
    assert out.shape == (B, S, output_dim)
    assert jnp.allclose(out, ref, atol=1e-5, rtol=1e-5), "mismatch vs reference (small)"

    # Larger-M check to exercise the row grid, row padding, and output slicing.
    key, kx2 = jax.random.split(key)
    x_big = jax.random.normal(kx2, (3, 500, input_dim), jnp.float32)  # M=1500 -> 2 tiles
    out_big = jax.block_until_ready(
        euler_maruyama_nn_forward(x_big, prepared, out_dim=output_dim)
    )
    ref_big = _reference_forward(x_big, params)
    assert out_big.shape == (3, 500, output_dim)
    assert jnp.allclose(out_big, ref_big, atol=1e-5, rtol=1e-5), "mismatch vs reference (big)"

    print("KERNEL_OK")
</pallas_src>

<mosaic_0001>
module attributes {stable_mosaic.version = 11 : i64} {
  func.func @_mlp_kernel(%arg0: i32, %arg1: memref<16x4xf32, #tpu.memory_space<vmem>>, %arg2: memref<4x32xf32, #tpu.memory_space<vmem>>, %arg3: memref<1x32xf32, #tpu.memory_space<vmem>>, %arg4: memref<32x32xf32, #tpu.memory_space<vmem>>, %arg5: memref<1x32xf32, #tpu.memory_space<vmem>>, %arg6: memref<32x128xf32, #tpu.memory_space<vmem>>, %arg7: memref<1x128xf32, #tpu.memory_space<vmem>>, %arg8: memref<16x128xf32, #tpu.memory_space<vmem>>) attributes {dimension_semantics = [#tpu.dimension_semantics<parallel>], iteration_bounds = array<i64: 1>, scalar_prefetch = 0 : i64, scratch_operands = 0 : i64, tpu.core_type = #tpu.core_type<tc>, window_params = [{transform_indices = @transform_0, window_bounds = array<i64: 16, 4>}, {pipeline_mode = #tpu.pipeline_mode<synchronous>, transform_indices = @transform_1, window_bounds = array<i64: 4, 32>}, {pipeline_mode = #tpu.pipeline_mode<synchronous>, transform_indices = @transform_2, window_bounds = array<i64: 1, 32>}, {pipeline_mode = #tpu.pipeline_mode<synchronous>, transform_indices = @transform_3, window_bounds = array<i64: 32, 32>}, {pipeline_mode = #tpu.pipeline_mode<synchronous>, transform_indices = @transform_4, window_bounds = array<i64: 1, 32>}, {pipeline_mode = #tpu.pipeline_mode<synchronous>, transform_indices = @transform_5, window_bounds = array<i64: 32, 128>}, {pipeline_mode = #tpu.pipeline_mode<synchronous>, transform_indices = @transform_6, window_bounds = array<i64: 1, 128>}, {transform_indices = @transform_7, window_bounds = array<i64: 16, 128>}]} {
    %c0 = arith.constant 0 : index
    %c0_0 = arith.constant 0 : index
    %0 = vector.load %arg1[%c0, %c0_0] : memref<16x4xf32, #tpu.memory_space<vmem>>, vector<16x4xf32>
    %c0_1 = arith.constant 0 : index
    %c0_2 = arith.constant 0 : index
    %1 = vector.load %arg2[%c0_1, %c0_2] : memref<4x32xf32, #tpu.memory_space<vmem>>, vector<4x32xf32>
    %cst = arith.constant dense<0.000000e+00> : vector<16x32xf32>
    %2 = tpu.matmul %0, %1, %cst {dimension_numbers = #tpu.dot_dimension_numbers<[1], [0], [0], [1], [0, 0, 1, 1], [], []>} : vector<16x4xf32>, vector<4x32xf32>, vector<16x32xf32> -> vector<16x32xf32>
    %c0_3 = arith.constant 0 : index
    %c0_4 = arith.constant 0 : index
    %3 = vector.load %arg3[%c0_3, %c0_4] : memref<1x32xf32, #tpu.memory_space<vmem>>, vector<1x32xf32>
    %4 = vector.broadcast %3 : vector<1x32xf32> to vector<16x32xf32>
    %5 = arith.addf %2, %4 : vector<16x32xf32>
    %6 = math.tanh %5 : vector<16x32xf32>
    %c0_5 = arith.constant 0 : index
    %c0_6 = arith.constant 0 : index
    %7 = vector.load %arg4[%c0_5, %c0_6] : memref<32x32xf32, #tpu.memory_space<vmem>>, vector<32x32xf32>
    %cst_7 = arith.constant dense<0.000000e+00> : vector<16x32xf32>
    %8 = tpu.matmul %6, %7, %cst_7 {dimension_numbers = #tpu.dot_dimension_numbers<[1], [0], [0], [1], [0, 0, 1, 1], [], []>} : vector<16x32xf32>, vector<32x32xf32>, vector<16x32xf32> -> vector<16x32xf32>
    %c0_8 = arith.constant 0 : index
    %c0_9 = arith.constant 0 : index
    %9 = vector.load %arg5[%c0_8, %c0_9] : memref<1x32xf32, #tpu.memory_space<vmem>>, vector<1x32xf32>
    %10 = vector.broadcast %9 : vector<1x32xf32> to vector<16x32xf32>
    %11 = arith.addf %8, %10 : vector<16x32xf32>
    %12 = math.tanh %11 : vector<16x32xf32>
    %c0_10 = arith.constant 0 : index
    %c0_11 = arith.constant 0 : index
    %13 = vector.load %arg6[%c0_10, %c0_11] : memref<32x128xf32, #tpu.memory_space<vmem>>, vector<32x128xf32>
    %cst_12 = arith.constant dense<0.000000e+00> : vector<16x128xf32>
    %14 = tpu.matmul %12, %13, %cst_12 {dimension_numbers = #tpu.dot_dimension_numbers<[1], [0], [0], [1], [0, 0, 1, 1], [], []>} : vector<16x32xf32>, vector<32x128xf32>, vector<16x128xf32> -> vector<16x128xf32>
    %c0_13 = arith.constant 0 : index
    %c0_14 = arith.constant 0 : index
    %15 = vector.load %arg7[%c0_13, %c0_14] : memref<1x128xf32, #tpu.memory_space<vmem>>, vector<1x128xf32>
    %16 = vector.broadcast %15 : vector<1x128xf32> to vector<16x128xf32>
    %17 = arith.addf %14, %16 : vector<16x128xf32>
    %18 = arith.negf %17 : vector<16x128xf32>
    %19 = math.exp %18 : vector<16x128xf32>
    %cst_15 = arith.constant 1.000000e+00 : f32
    %20 = vector.broadcast %cst_15 : f32 to vector<16x128xf32>
    %21 = arith.addf %20, %19 : vector<16x128xf32>
    %22 = arith.divf %20, %21 : vector<16x128xf32>
    %c0_16 = arith.constant 0 : index
    %c0_17 = arith.constant 0 : index
    %23 = vector.load %arg8[%c0_16, %c0_17] : memref<16x128xf32, #tpu.memory_space<vmem>>, vector<16x128xf32>
    tpu.vector_store %arg8[%c0_16, %c0_17], %22 {strides = array<i32>} : memref<16x128xf32, #tpu.memory_space<vmem>>, vector<16x128xf32>,
    return
  }
  func.func @transform_0(%arg0: i32) -> (i32, i32) {
    %c0_i32 = arith.constant 0 : i32
    %c0_i32_0 = arith.constant 0 : i32
    return %arg0, %c0_i32 : i32, i32
  }
  func.func @transform_1(%arg0: i32) -> (i32, i32) {
    %c0_i32 = arith.constant 0 : i32
    %c0_i32_0 = arith.constant 0 : i32
    %c0_i32_1 = arith.constant 0 : i32
    return %c0_i32, %c0_i32_0 : i32, i32
  }
  func.func @transform_2(%arg0: i32) -> (i32, i32) {
    %c0_i32 = arith.constant 0 : i32
    %c0_i32_0 = arith.constant 0 : i32
    %c0_i32_1 = arith.constant 0 : i32
    return %c0_i32, %c0_i32_0 : i32, i32
  }
  func.func @transform_3(%arg0: i32) -> (i32, i32) {
    %c0_i32 = arith.constant 0 : i32
    %c0_i32_0 = arith.constant 0 : i32
    %c0_i32_1 = arith.constant 0 : i32
    return %c0_i32, %c0_i32_0 : i32, i32
  }
  func.func @transform_4(%arg0: i32) -> (i32, i32) {
    %c0_i32 = arith.constant 0 : i32
    %c0_i32_0 = arith.constant 0 : i32
    %c0_i32_1 = arith.constant 0 : i32
    return %c0_i32, %c0_i32_0 : i32, i32
  }
  func.func @transform_5(%arg0: i32) -> (i32, i32) {
    %c0_i32 = arith.constant 0 : i32
    %c0_i32_0 = arith.constant 0 : i32
    %c0_i32_1 = arith.constant 0 : i32
    return %c0_i32, %c0_i32_0 : i32, i32
  }
  func.func @transform_6(%arg0: i32) -> (i32, i32) {
    %c0_i32 = arith.constant 0 : i32
    %c0_i32_0 = arith.constant 0 : i32
    %c0_i32_1 = arith.constant 0 : i32
    return %c0_i32, %c0_i32_0 : i32, i32
  }
  func.func @transform_7(%arg0: i32) -> (i32, i32) {
    %c0_i32 = arith.constant 0 : i32
    %c0_i32_0 = arith.constant 0 : i32
    return %arg0, %c0_i32 : i32, i32
  }
}

</mosaic_0001>

<llo_original>
// kernel: euler_maruyama_nn_forward.1
$region0: #{euler_maruyama_nn_forward.1}
  #allocation0 [shape = 'u32[]', space=smem, size = 0x4, offset = 0x4, fixed_abs, tag = 'smem constant byte address 0x4 - core index']
  #allocation1 [shape = 'u32[144,128]{1,0:T(1,128)}', space=vmem, size = 0x12000, scoped, tag = 'internal scratch']
  %s0 = inlined_call_operand.vmem [shape: f32[16,4], index: 0, kind: input, shape index: {}]
  %s1 = inlined_call_operand.hbm [shape: f32[4,32], index: 1, kind: input, shape index: {}]
  %s2 = inlined_call_operand.vmem [shape: f32[1,32], index: 2, kind: input, shape index: {}]
  %s3 = inlined_call_operand.hbm [shape: f32[32,32], index: 3, kind: input, shape index: {}]
  %s4 = inlined_call_operand.vmem [shape: f32[1,32], index: 4, kind: input, shape index: {}]
  %s5 = inlined_call_operand.vmem [shape: f32[32,128], index: 5, kind: input, shape index: {}]
  %s6 = inlined_call_operand.vmem [shape: f32[1,128], index: 6, kind: input, shape index: {}]
  %s7 = inlined_call_operand.vmem [shape: f32[16,128], index: 7, kind: output, shape index: {}]
  %s8 = sld [smem:[#allocation0]]
  $region46: #{euler_maruyama_nn_forward.1} parent=0
    _
  %s10 = ssub.s32 1, %s8
  %s11 = scalar_select 0, %s10, %s8
  $region1: #{euler_maruyama_nn_forward.1} parent=0
    #allocation2 [shape = 'u8[2048]{0}', space=vmem, size = 0x800, scoped, tag = 'input window, operand 1, single buffered']
    #allocation3 [shape = 's32[1]{0}', space=sflag, size = 0x4, scoped, tag = 'scoped memory for euler_maruyama_nn_forward.1']
    #allocation4 [shape = 'u8[16384]{0}', space=vmem, size = 0x4000, scoped, tag = 'input window, operand 3, single buffered']
    #allocation5 [shape = 's32[1]{0}', space=sflag, size = 0x4, scoped, tag = 'scoped memory for euler_maruyama_nn_forward.1']
    %12 = vsyncpa [#allocation3], 0
    %13 = vsyncpa [#allocation5], 0
    // Predicated region
    $region2: #{euler_maruyama_nn_forward.1} parent=1 // pred_check
      _
    $region3: #{euler_maruyama_nn_forward.1} parent=1 // pred_check_branch
      %15 = sbr.rel (0) target = $region5
    $region4: #{euler_maruyama_nn_forward.1} parent=1 // pred_region
      _
    $region5: #{euler_maruyama_nn_forward.1} parent=1 // pred_fallthru
      _
    // Predicated region
    $region6: #{euler_maruyama_nn_forward.1} parent=1 // pred_check
      _
    $region7: #{euler_maruyama_nn_forward.1} parent=1 // pred_check_branch
      %17 = sbr.rel (0) target = $region9
    $region8: #{euler_maruyama_nn_forward.1} parent=1 // pred_region
      %s19 = ssub.s32 64, 64
      %20 = vsyncadd [#allocation3], %s19
      %s22 = sshll.u32 [#allocation2], 4
      %s23 = int_to_ptr.vmem [resolvable:$true] %s22
      %25 = dma.hbm_to_vmem [thread:$0]  %s1, 64, %s23, [#allocation3]
    $region9: #{euler_maruyama_nn_forward.1} parent=1 // pred_fallthru
      _
    // Predicated region
    $region10: #{euler_maruyama_nn_forward.1} parent=1 // pred_check
      _
    $region11: #{euler_maruyama_nn_forward.1} parent=1 // pred_check_branch
      %27 = sbr.rel (0) target = $region13
    $region12: #{euler_maruyama_nn_forward.1} parent=1 // pred_region
      _
    $region13: #{euler_maruyama_nn_forward.1} parent=1 // pred_fallthru
      _
    // Predicated region
    $region14: #{euler_maruyama_nn_forward.1} parent=1 // pred_check
      _
    $region15: #{euler_maruyama_nn_forward.1} parent=1 // pred_check_branch
      %29 = sbr.rel (0) target = $region17
    $region16: #{euler_maruyama_nn_forward.1} parent=1 // pred_region
      %s31 = ssub.s32 512, 512
      %32 = vsyncadd [#allocation5], %s31
      %s33 = sshll.u32 [#allocation4], 4
      %s34 = int_to_ptr.vmem [resolvable:$true] %s33
      %39 = dma.hbm_to_vmem [thread:$0]  %s3, 512, %s34, [#allocation5], 128, 128, 8
    $region17: #{euler_maruyama_nn_forward.1} parent=1 // pred_fallthru
      _
    // Predicated region
    $region18: #{euler_maruyama_nn_forward.1} parent=1 // pred_check
      _
    $region19: #{euler_maruyama_nn_forward.1} parent=1 // pred_check_branch
      %41 = sbr.rel (0) target = $region21
    $region20: #{euler_maruyama_nn_forward.1} parent=1 // pred_region
      _
    $region21: #{euler_maruyama_nn_forward.1} parent=1 // pred_fallthru
      _
    // Predicated region
    $region22: #{euler_maruyama_nn_forward.1} parent=1 // pred_check
      _
    $region23: #{euler_maruyama_nn_forward.1} parent=1 // pred_check_branch
      %43 = sbr.rel (0) target = $region25
    $region24: #{euler_maruyama_nn_forward.1} parent=1 // pred_region
      _
    $region25: #{euler_maruyama_nn_forward.1} parent=1 // pred_fallthru
      _
    // Predicated region
    $region26: #{euler_maruyama_nn_forward.1} parent=1 // pred_check
      _
    $region27: #{euler_maruyama_nn_forward.1} parent=1 // pred_check_branch
      %45 = sbr.rel (0) target = $region29
    $region28: #{euler_maruyama_nn_forward.1} parent=1 // pred_region
      _
    $region29: #{euler_maruyama_nn_forward.1} parent=1 // pred_fallthru
      _
    // Predicated region
    $region30: #{euler_maruyama_nn_forward.1} parent=1 // pred_check
      _
    $region31: #{euler_maruyama_nn_forward.1} parent=1 // pred_check_branch
      %47 = sbr.rel (0) target = $region33
    $region32: #{euler_maruyama_nn_forward.1} parent=1 // pred_region
      %48 = dma.done [#allocation3], 64
    $region33: #{euler_maruyama_nn_forward.1} parent=1 // pred_fallthru
      _
    // Predicated region
    $region34: #{euler_maruyama_nn_forward.1} parent=1 // pred_check
      _
    $region35: #{euler_maruyama_nn_forward.1} parent=1 // pred_check_branch
      %50 = sbr.rel (0) target = $region37
    $region36: #{euler_maruyama_nn_forward.1} parent=1 // pred_region
      %51 = dma.done [#allocation5], 512
    $region37: #{euler_maruyama_nn_forward.1} parent=1 // pred_fallthru
      _
    %v52 = vld [vmem:[%s0] sm:$0xff]
    %v53 = vld [vmem:[%s0 + $0x8] sm:$0xff]
    %v54 = vld [vmem:[#allocation2] sm:$0xf]
    %v55 = vld [vmem:[%s2] sm:$0x1]
    %v57 = vlaneseq
    %v58 = vshrl.u32 %v57, 7
    %v59 = vsub.s32 0, %v58
    %v60 = vrot.slane %v55, %v59
    %vm62 = vcmask 31744
    %v64 = vsel %vm62, %v52, 0
    %v67 = vsel %vm62, %v53, 0
    %vm69 = vcmask 1043456
    %v71 = vsel %vm69, %v54, 0
    %73 = vmatprep.subr.mxu0 0.0
    %74 = vmatpush1.msra.mxu0 0.0
    %75 = vmatprep.subr.mxu0 0.0
    %76 = vmatpush1.msra.mxu0 0.0
    %77 = vmatprep.subr.mxu0 0.0
    %78 = vmatpush1.msra.mxu0 0.0
    %79 = vmatprep.subr.mxu0 0.0
    %80 = vmatpush1.msra.mxu0 0.0
    %81 = vmatprep.subr.mxu0 0.0
    %82 = vmatpush1.msra.mxu0 0.0
    %83 = vmatprep.subr.mxu0 0.0
    %84 = vmatpush1.msra.mxu0 0.0
    %85 = vmatprep.subr.mxu0 0.0
    %86 = vmatpush1.msra.mxu0 0.0
    %87 = vmatprep.subr.mxu0 0.0
    %88 = vmatpush1.msra.mxu0 0.0
    %89 = vmatprep.subr.mxu0 0.0
    %90 = vmatpush1.msra.mxu0 0.0
    %91 = vmatprep.subr.mxu0 0.0
    %92 = vmatpush1.msra.mxu0 0.0
    %93 = vmatprep.subr.mxu0 0.0
    %94 = vmatpush1.msra.mxu0 0.0
    %95 = vmatprep.subr.mxu0 0.0
    %96 = vmatpush1.msra.mxu0 0.0
    %97 = vmatprep.subr.mxu0 0.0
    %98 = vmatpush1.msra.mxu0 0.0
    %99 = vmatprep.subr.mxu0 0.0
    %100 = vmatpush1.msra.mxu0 0.0
    %101 = vmatprep.subr.mxu0 0.0
    %102 = vmatpush1.msra.mxu0 0.0
    %103 = vmatprep.subr.mxu0 0.0
    %104 = vmatpush1.msra.mxu0 %v71
    %105 = vmatprep.subr.mxu0 0.0
    %106 = vmatpush2.msra.mxu0 0.0
    %107 = vmatprep.subr.mxu0 0.0
    %108 = vmatpush2.msra.mxu0 0.0
    %109 = vmatprep.subr.mxu0 0.0
    %110 = vmatpush2.msra.mxu0 0.0
    %111 = vmatprep.subr.mxu0 0.0
    %112 = vmatpush2.msra.mxu0 0.0
    %113 = vmatprep.subr.mxu0 0.0
    %114 = vmatpush2.msra.mxu0 0.0
    %115 = vmatprep.subr.mxu0 0.0
    %116 = vmatpush2.msra.mxu0 0.0
    %117 = vmatprep.subr.mxu0 0.0
    %118 = vmatpush2.msra.mxu0 0.0
    %119 = vmatprep.subr.mxu0 0.0
    %120 = vmatpush2.msra.mxu0 0.0
    %121 = vmatprep.subr.mxu0 0.0
    %122 = vmatpush2.msra.mxu0 0.0
    %123 = vmatprep.subr.mxu0 0.0
    %124 = vmatpush2.msra.mxu0 0.0
    %125 = vmatprep.subr.mxu0 0.0
    %126 = vmatpush2.msra.mxu0 0.0
    %127 = vmatprep.subr.mxu0 0.0
    %128 = vmatpush2.msra.mxu0 0.0
    %129 = vmatprep.subr.mxu0 0.0
    %130 = vmatpush2.msra.mxu0 0.0
    %131 = vmatprep.subr.mxu0 0.0
    %132 = vmatpush2.msra.mxu0 0.0
    %133 = vmatprep.subr.mxu0 0.0
    %134 = vmatpush2.msra.mxu0 0.0
    %135 = vmatprep.subr.mxu0 0.0
    %136 = vmatpush2.msra.mxu0 0.0
    %137 = vmatprep.mubr.f32.mxu0 0.0
    %138 = vmatmul.mubr.f32.gmra.mxu0 %v64
    %v139 = vpop.f32.mrf.mxu0
    %v140 = vadd.f32 %v60, %v139
    %v141 = vpop.f32.mrf.mxu0
    %142 = vmatprep.mubr.f32.mxu0 0.0
    %143 = vmatmul.mubr.f32.gmra.mxu0 %v67
    %v144 = vpop.f32.mrf.mxu0
    %v145 = vadd.f32 %v60, %v144
    %v146 = vpop.f32.mrf.mxu0
    %147 = vdwg.mxu0
    %v148 = vtanh.pop %v140
    %v149 = vtanh.pop %v145
    %v150 = vld [vmem:[#allocation4] sm:$0xff]
    %v151 = vld [vmem:[#allocation4 + $0x8] sm:$0xff]
    %v152 = vld [vmem:[#allocation4 + $0x10] sm:$0xff]
    %v153 = vld [vmem:[#allocation4 + $0x18] sm:$0xff]
    %v154 = vld [vmem:[%s4] sm:$0x1]
    %v156 = vlaneseq
    %v157 = vshrl.u32 %v156, 7
    %v158 = vsub.s32 0, %v157
    %v159 = vrot.slane %v154, %v158
    %vm161 = vcmask 261120
    %v163 = vsel %vm161, %v148, 0
    %v166 = vsel %vm161, %v149, 0
    %168 = vmatprep.subr.mxu0 0.0
    %169 = vmatpush1.msra.mxu0 0.0
    %170 = vmatprep.subr.mxu0 0.0
    %171 = vmatpush1.msra.mxu0 0.0
    %172 = vmatprep.subr.mxu0 0.0
    %173 = vmatpush1.msra.mxu0 0.0
    %174 = vmatprep.subr.mxu0 0.0
    %175 = vmatpush1.msra.mxu0 0.0
    %176 = vmatprep.subr.mxu0 0.0
    %177 = vmatpush1.msra.mxu0 0.0
    %178 = vmatprep.subr.mxu0 0.0
    %179 = vmatpush1.msra.mxu0 0.0
    %180 = vmatprep.subr.mxu0 0.0
    %181 = vmatpush1.msra.mxu0 0.0
    %182 = vmatprep.subr.mxu0 0.0
    %183 = vmatpush1.msra.mxu0 0.0
    %184 = vmatprep.subr.mxu0 0.0
    %185 = vmatpush1.msra.mxu0 0.0
    %186 = vmatprep.subr.mxu0 0.0
    %187 = vmatpush1.msra.mxu0 0.0
    %188 = vmatprep.subr.mxu0 0.0
    %189 = vmatpush1.msra.mxu0 0.0
    %190 = vmatprep.subr.mxu0 0.0
    %191 = vmatpush1.msra.mxu0 0.0
    %192 = vmatprep.subr.mxu0 0.0
    %193 = vmatpush1.msra.mxu0 %v153
    %194 = vmatprep.subr.mxu0 0.0
    %195 = vmatpush1.msra.mxu0 %v152
    %196 = vmatprep.subr.mxu0 0.0
    %197 = vmatpush1.msra.mxu0 %v151
    %198 = vmatprep.subr.mxu0 0.0
    %199 = vmatpush1.msra.mxu0 %v150
    %200 = vmatprep.subr.mxu0 0.0
    %201 = vmatpush2.msra.mxu0 0.0
    %202 = vmatprep.subr.mxu0 0.0
    %203 = vmatpush2.msra.mxu0 0.0
    %204 = vmatprep.subr.mxu0 0.0
    %205 = vmatpush2.msra.mxu0 0.0
    %206 = vmatprep.subr.mxu0 0.0
    %207 = vmatpush2.msra.mxu0 0.0
    %208 = vmatprep.subr.mxu0 0.0
    %209 = vmatpush2.msra.mxu0 0.0
    %210 = vmatprep.subr.mxu0 0.0
    %211 = vmatpush2.msra.mxu0 0.0
    %212 = vmatprep.subr.mxu0 0.0
    %213 = vmatpush2.msra.mxu0 0.0
    %214 = vmatprep.subr.mxu0 0.0
    %215 = vmatpush2.msra.mxu0 0.0
    %216 = vmatprep.subr.mxu0 0.0
    %217 = vmatpush2.msra.mxu0 0.0
    %218 = vmatprep.subr.mxu0 0.0
    %219 = vmatpush2.msra.mxu0 0.0
    %220 = vmatprep.subr.mxu0 0.0
    %221 = vmatpush2.msra.mxu0 0.0
    %222 = vmatprep.subr.mxu0 0.0
    %223 = vmatpush2.msra.mxu0 0.0
    %224 = vmatprep.subr.mxu0 0.0
    %225 = vmatpush2.msra.mxu0 0.0
    %226 = vmatprep.subr.mxu0 0.0
    %227 = vmatpush2.msra.mxu0 0.0
    %228 = vmatprep.subr.mxu0 0.0
    %229 = vmatpush2.msra.mxu0 0.0
    %230 = vmatprep.subr.mxu0 0.0
    %231 = vmatpush2.msra.mxu0 0.0
    %232 = vmatprep.mubr.f32.mxu0 0.0
    %233 = vmatmul.mubr.f32.gmra.mxu0 %v163
    %v234 = vpop.f32.mrf.mxu0
    %v235 = vadd.f32 %v159, %v234
    %v236 = vpop.f32.mrf.mxu0
    %237 = vmatprep.mubr.f32.mxu0 0.0
    %238 = vmatmul.mubr.f32.gmra.mxu0 %v166
    %v239 = vpop.f32.mrf.mxu0
    %v240 = vadd.f32 %v159, %v239
    %v241 = vpop.f32.mrf.mxu0
    %242 = vdwg.mxu0
    %v243 = vtanh.pop %v235
    %v244 = vtanh.pop %v240
    %v245 = vld [vmem:[%s5] sm:$0xff]
    %v246 = vld [vmem:[%s5 + $0x8] sm:$0xff]
    %v247 = vld [vmem:[%s5 + $0x10] sm:$0xff]
    %v248 = vld [vmem:[%s5 + $0x18] sm:$0xff]
    %v249 = vld [vmem:[%s6] sm:$0x1]
    %v251 = vlaneseq
    %v252 = vshrl.u32 %v251, 7
    %v253 = vsub.s32 0, %v252
    %v254 = vrot.slane %v249, %v253
    %v257 = vsel %vm161, %v243, 0
    %v260 = vsel %vm161, %v244, 0
    %262 = vmatprep.subr.mxu0 0.0
    %263 = vmatpush1.msra.mxu0 0.0
    %264 = vmatprep.subr.mxu0 0.0
    %265 = vmatpush1.msra.mxu0 0.0
    %266 = vmatprep.subr.mxu0 0.0
    %267 = vmatpush1.msra.mxu0 0.0
    %268 = vmatprep.subr.mxu0 0.0
    %269 = vmatpush1.msra.mxu0 0.0
    %270 = vmatprep.subr.mxu0 0.0
    %271 = vmatpush1.msra.mxu0 0.0
    %272 = vmatprep.subr.mxu0 0.0
    %273 = vmatpush1.msra.mxu0 0.0
    %274 = vmatprep.subr.mxu0 0.0
    %275 = vmatpush1.msra.mxu0 0.0
    %276 = vmatprep.subr.mxu0 0.0
    %277 = vmatpush1.msra.mxu0 0.0
    %278 = vmatprep.subr.mxu0 0.0
    %279 = vmatpush1.msra.mxu0 0.0
    %280 = vmatprep.subr.mxu0 0.0
    %281 = vmatpush1.msra.mxu0 0.0
    %282 = vmatprep.subr.mxu0 0.0
    %283 = vmatpush1.msra.mxu0 0.0
    %284 = vmatprep.subr.mxu0 0.0
    %285 = vmatpush1.msra.mxu0 0.0
    %286 = vmatprep.subr.mxu0 0.0
    %287 = vmatpush1.msra.mxu0 %v248
    %288 = vmatprep.subr.mxu0 0.0
    %289 = vmatpush1.msra.mxu0 %v247
    %290 = vmatprep.subr.mxu0 0.0
    %291 = vmatpush1.msra.mxu0 %v246
    %292 = vmatprep.subr.mxu0 0.0
    %293 = vmatpush1.msra.mxu0 %v245
    %294 = vmatprep.subr.mxu0 0.0
    %295 = vmatpush2.msra.mxu0 0.0
    %296 = vmatprep.subr.mxu0 0.0
    %297 = vmatpush2.msra.mxu0 0.0
    %298 = vmatprep.subr.mxu0 0.0
    %299 = vmatpush2.msra.mxu0 0.0
    %300 = vmatprep.subr.mxu0 0.0
    %301 = vmatpush2.msra.mxu0 0.0
    %302 = vmatprep.subr.mxu0 0.0
    %303 = vmatpush2.msra.mxu0 0.0
    %304 = vmatprep.subr.mxu0 0.0
    %305 = vmatpush2.msra.mxu0 0.0
    %306 = vmatprep.subr.mxu0 0.0
    %307 = vmatpush2.msra.mxu0 0.0
    %308 = vmatprep.subr.mxu0 0.0
    %309 = vmatpush2.msra.mxu0 0.0
    %310 = vmatprep.subr.mxu0 0.0
    %311 = vmatpush2.msra.mxu0 0.0
    %312 = vmatprep.subr.mxu0 0.0
    %313 = vmatpush2.msra.mxu0 0.0
    %314 = vmatprep.subr.mxu0 0.0
    %315 = vmatpush2.msra.mxu0 0.0
    %316 = vmatprep.subr.mxu0 0.0
    %317 = vmatpush2.msra.mxu0 0.0
    %318 = vmatprep.subr.mxu0 0.0
    %319 = vmatpush2.msra.mxu0 0.0
    %320 = vmatprep.subr.mxu0 0.0
    %321 = vmatpush2.msra.mxu0 0.0
    %322 = vmatprep.subr.mxu0 0.0
    %323 = vmatpush2.msra.mxu0 0.0
    %324 = vmatprep.subr.mxu0 0.0
    %325 = vmatpush2.msra.mxu0 0.0
    %326 = vmatprep.mubr.f32.mxu0 0.0
    %327 = vmatmul.mubr.f32.gmra.mxu0 %v257
    %v328 = vpop.f32.mrf.mxu0
    %v329 = vadd.f32 %v254, %v328
    %v330 = vpop.f32.mrf.mxu0
    %331 = vmatprep.mubr.f32.mxu0 0.0
    %332 = vmatmul.mubr.f32.gmra.mxu0 %v260
    %v333 = vpop.f32.mrf.mxu0
    %v334 = vadd.f32 %v254, %v333
    %v335 = vpop.f32.mrf.mxu0
    %336 = vdwg.mxu0
    %v337 = vxor.u32 %v329, 2147483648
    %v338 = vxor.u32 %v334, 2147483648
    %v339 = vmul.f32 %v337, 1.442695
    %v340 = vpow.pop %v339
    %v341 = vmul.f32 %v338, 1.442695
    %v342 = vpow.pop %v341
    %v343 = vadd.f32 %v340, 1.0
    %v344 = vadd.f32 %v342, 1.0
    %v345 = vrcp.pop %v343
    %v346 = vmul.f32 1.0, %v345
    %v347 = vrcp.pop %v344
    %v348 = vmul.f32 1.0, %v347
    %349 = vst [vmem:[%s7] sm:$0xff] %v346
    %350 = vst [vmem:[%s7 + $0x8] sm:$0xff] %v348
    // Predicated region
    $region38: #{euler_maruyama_nn_forward.1} parent=1 // pred_check
      _
    $region39: #{euler_maruyama_nn_forward.1} parent=1 // pred_check_branch
      %352 = sbr.rel (0) target = $region41
    $region40: #{euler_maruyama_nn_forward.1} parent=1 // pred_region
      _
    $region41: #{euler_maruyama_nn_forward.1} parent=1 // pred_fallthru
      _
    // Predicated region
    $region42: #{euler_maruyama_nn_forward.1} parent=1 // pred_check
      _
    $region43: #{euler_maruyama_nn_forward.1} parent=1 // pred_check_branch
      %354 = sbr.rel (0) target = $region45
    $region44: #{euler_maruyama_nn_forward.1} parent=1 // pred_region
      _
    $region45: #{euler_maruyama_nn_forward.1} parent=1 // pred_fallthru
      _
    %355 = vsyncpa [#allocation3], 1
    %356 = vsyncpa [#allocation5], 1

</llo_original>
